<compile_context>
chip_gen: v5e
topology: v5e:2x2
jax: 0.10.0
libtpu: 0.0.40
codegen_flags: <defaults>
</compile_context>

<pallas_src>
import functools

import jax
import jax.numpy as jnp
from jax.experimental import pallas as pl
from jax.experimental.pallas import tpu as pltpu

LANE = 128
SUBLANE = 8


def _round_up(x, m):
    return (x + m - 1) // m * m


# ----------------------------- Pallas kernel -----------------------------

def _icm_fwd_kernel(obs_ref, act_ref, w1o_ref, w1a_ref, b1_ref,
                    w2_ref, b2_ref, w3_ref, b3_ref, o_ref, *, discrete):
    obs = obs_ref[...]                                       # bf16 (tile_b, obs_p)

    if discrete:
        # In-kernel one_hot: class iota vs int32 ids; padded classes never match.
        classes = jax.lax.broadcasted_iota(
            jnp.int32, (obs_ref.shape[0], w1a_ref.shape[0]), 1)
        act_f = jnp.where(classes == act_ref[...], 1.0, 0.0).astype(jnp.bfloat16)
    else:
        act_f = act_ref[...]                                 # bf16 (tile_b, act_p)

    # Layer 1: split contraction (obs part + action part) == concat @ W1.
    h1 = (jnp.dot(obs, w1o_ref[...], preferred_element_type=jnp.float32)
          + jnp.dot(act_f, w1a_ref[...], preferred_element_type=jnp.float32)
          + b1_ref[...])
    h1 = jnp.maximum(h1, 0.0)                                # ReLU (f32, VPU)

    h2 = jnp.dot(h1.astype(jnp.bfloat16), w2_ref[...],
                 preferred_element_type=jnp.float32) + b2_ref[...]
    h2 = jnp.maximum(h2, 0.0)                                # ReLU

    out = jnp.dot(h2.astype(jnp.bfloat16), w3_ref[...],
                  preferred_element_type=jnp.float32) + b3_ref[...]
    o_ref[...] = out.astype(o_ref.dtype)                     # bf16 writeback


def icm_forward_pallas(enc_obs, act, kparams, out_size, *, discrete,
                       tile_b_max=1024):
    """enc_obs: [B, obs_dim] float; act: [B,1] int32 ids (discrete) or
    [B, act_feat] float features.  Returns [B, out_size] f32."""
    w1o, w1a, b1, w2, b2, w3, b3 = (
        kparams[k] for k in ("w1_obs", "w1_act", "b1", "w2", "b2", "w3", "b3"))
    obs_p, hid_p = w1o.shape
    act_p = w1a.shape[0]
    out_p = w3.shape[1]
    B, obs_dim = enc_obs.shape

    # Batch tiling: sublane-aligned, large (amortize per-step overhead), but
    # >=2 grid steps when B allows so the "parallel" axis feeds both v7x TCs.
    tile_b_max = max(SUBLANE, (int(tile_b_max) // SUBLANE) * SUBLANE)
    half = _round_up(pl.cdiv(B, 2), SUBLANE)
    tile_b = max(SUBLANE, min(tile_b_max, half))
    b_pad = _round_up(B, tile_b)
    grid = (b_pad // tile_b,)

    # bf16, lane-dense, sublane-aligned activation slabs (half the f32 bytes).
    obs_pd = jnp.zeros((b_pad, obs_p), jnp.bfloat16).at[:B, :obs_dim].set(
        enc_obs.astype(jnp.bfloat16))
    if discrete:
        act_pd = jnp.zeros((b_pad, 1), jnp.int32).at[:B, :].set(
            act.astype(jnp.int32))
        act_spec = pl.BlockSpec((tile_b, 1), lambda i: (i, 0))
        act_k = act_p            # one-hot padded to act_p inside the kernel
    else:
        afd = act.shape[1]
        act_pd = jnp.zeros((b_pad, act_p), jnp.bfloat16).at[:B, :afd].set(
            act.astype(jnp.bfloat16))
        act_spec = pl.BlockSpec((tile_b, act_p), lambda i: (i, 0))
        act_k = act_p

    def row_spec(shape):          # batch-tiled activations
        return pl.BlockSpec(shape, lambda i: (i, 0))

    def resident_spec(shape):     # weights/biases: same block every grid step
        return pl.BlockSpec(shape, lambda i: (0, 0))

    weight_bytes = sum(a.size * a.dtype.itemsize for a in (w1o, w1a, b1, w2, b2, w3, b3))
    flops = 2 * b_pad * (obs_p * hid_p + act_k * hid_p + hid_p * hid_p + hid_p * out_p)
    bytes_accessed = (obs_pd.size * obs_pd.dtype.itemsize
                      + act_pd.size * act_pd.dtype.itemsize
                      + b_pad * out_p * 2            # bf16 output
                      + weight_bytes)

    # Real VMEM footprint: double-buffered in/out tiles + resident weights +
    # f32 intermediates; 2x headroom, clamped.
    tile_bytes = tile_b * (obs_p * 2 + act_pd.shape[1] * act_pd.dtype.itemsize
                           + out_p * 2 + hid_p * 4 * 2)
    vmem_limit = int(min(32 << 20, max(4 << 20, 2 * (2 * tile_bytes + weight_bytes))))

    out_padded = pl.pallas_call(
        functools.partial(_icm_fwd_kernel, discrete=discrete),
        out_shape=jax.ShapeDtypeStruct((b_pad, out_p), jnp.bfloat16),
        grid=grid,
        in_specs=[
            row_spec((tile_b, obs_p)),          # enc_obs tile (bf16)
            act_spec,                           # action ids / features tile
            resident_spec((obs_p, hid_p)),      # W1_obs
            resident_spec((act_p, hid_p)),      # W1_act
            resident_spec((1, hid_p)),          # b1
            resident_spec((hid_p, hid_p)),      # W2
            resident_spec((1, hid_p)),          # b2
            resident_spec((hid_p, out_p)),      # W3
            resident_spec((1, out_p)),          # b3
        ],
        out_specs=row_spec((tile_b, out_p)),
        compiler_params=pltpu.CompilerParams(
            dimension_semantics=("parallel",),  # megacore-shard the batch axis
            vmem_limit_bytes=vmem_limit,
        ),
        cost_estimate=pl.CostEstimate(
            flops=flops, transcendentals=0, bytes_accessed=bytes_accessed),
    )(obs_pd, act_pd, w1o, w1a, b1, w2, b2, w3, b3)

    # Slice away padding; module contract is f32 output.
    return out_padded[:B, :out_size].astype(jnp.float32)


# ----------------------------- Params -----------------------------

def init_params(key, in_dim, hidden_size, out_size, out_init):
    """Logical (unpadded) f32 params mimicking init_layer: scaled-normal W, zero bias."""
    k1, k2, k3 = jax.random.split(key, 3)
    return {
        "w1": jax.random.normal(k1, (in_dim, hidden_size), jnp.float32) / jnp.sqrt(in_dim),
        "b1": jnp.zeros((1, hidden_size), jnp.float32),
        "w2": jax.random.normal(k2, (hidden_size, hidden_size), jnp.float32) / jnp.sqrt(hidden_size),
        "b2": jnp.zeros((1, hidden_size), jnp.float32),
        "w3": jax.random.normal(k3, (hidden_size, out_size), jnp.float32) * out_init,
        "b3": jnp.zeros((1, out_size), jnp.float32),
    }


def prepare_params_for_kernel(params, obs_dim):
    """Split W1 into obs/action blocks and zero-pad all feature dims to 128
    lanes; weights -> bf16, biases -> f32.  Zero rows/cols + ReLU(0)=0 keep the
    padded network equivalent on the valid slice.  Done once, offline."""
    in_dim, hidden = params["w1"].shape
    out_size = params["w3"].shape[1]
    act_feat = in_dim - obs_dim
    obs_p = _round_up(obs_dim, LANE)
    act_p = _round_up(act_feat, LANE)
    hid_p = _round_up(hidden, LANE)
    out_p = _round_up(out_size, LANE)

    def pad2(a, rows, cols):
        return jnp.pad(a, ((0, rows - a.shape[0]), (0, cols - a.shape[1])))

    return {
        "w1_obs": pad2(params["w1"][:obs_dim], obs_p, hid_p).astype(jnp.bfloat16),
        "w1_act": pad2(params["w1"][obs_dim:], act_p, hid_p).astype(jnp.bfloat16),
        "b1": pad2(params["b1"], 1, hid_p).astype(jnp.float32),
        "w2": pad2(params["w2"], hid_p, hid_p).astype(jnp.bfloat16),
        "b2": pad2(params["b2"], 1, hid_p).astype(jnp.float32),
        "w3": pad2(params["w3"], hid_p, out_p).astype(jnp.bfloat16),
        "b3": pad2(params["b3"], 1, out_p).astype(jnp.float32),
    }


# ----------------------------- Module wrapper -----------------------------

def linear_forward_model(enc_obs_1, actions, kparams, *, act_dim, action_dtype, out_size):
    """Forward pass matching LinearForwardModel.forward."""
    if action_dtype == "discrete":
        ids = actions.reshape(actions.shape[0], -1).astype(jnp.int32)
        if ids.shape[1] == 1:
            # single discrete action: fuse one_hot+concat into the kernel.
            return icm_forward_pallas(enc_obs_1, ids, kparams, out_size, discrete=True)
        # multi-column discrete: build the flattened one-hot features here.
        oh = jax.nn.one_hot(ids, num_classes=act_dim[-1], dtype=jnp.float32)
        act_feats = oh.reshape(ids.shape[0], -1)
        return icm_forward_pallas(enc_obs_1, act_feats, kparams, out_size, discrete=False)
    act_feats = actions.reshape(actions.shape[0], -1).astype(jnp.float32)
    return icm_forward_pallas(enc_obs_1, act_feats, kparams, out_size, discrete=False)


# ----------------------------- Demo / self-test -----------------------------

if __name__ == "__main__":
    key = jax.random.PRNGKey(0)
    k_obs, k_act, k_par = jax.random.split(key, 3)

    # Small synthetic config.
    batch = 8
    enc_dim = 24                      # encoded observation dim
    act_dim = (1, 8)                  # discrete action space with 8 classes
    n_onehot = act_dim[-1]
    in_dim = enc_dim + n_onehot       # 32 (concat of obs + one-hot actions)
    hidden_size = 32
    out_dim = enc_dim                 # predict encoded next-state (24)
    out_init = 0.01
    action_dtype = "discrete"

    params = init_params(k_par, in_dim, hidden_size, out_dim, out_init)
    kparams = prepare_params_for_kernel(params, obs_dim=enc_dim)

    enc_obs_1 = jax.random.normal(k_obs, (batch, enc_dim), jnp.float32)
    actions = jax.random.randint(k_act, (batch, 1), 0, n_onehot, dtype=jnp.int32)

    out = linear_forward_model(enc_obs_1, actions, kparams,
                               act_dim=act_dim, action_dtype=action_dtype,
                               out_size=out_dim)
    out = jax.block_until_ready(out)
    assert out.shape == (batch, out_dim), out.shape

    # --- Reference 1: mirrors the kernel numerics (bf16 MXU inputs, f32 acc,
    #     bf16 writeback) on the same padded params -> tight tolerance.
    oh = jax.nn.one_hot(actions.reshape(-1), n_onehot, dtype=jnp.float32)
    obs_p, hid_p = kparams["w1_obs"].shape
    act_p = kparams["w1_act"].shape[0]
    obs_pd = jnp.zeros((batch, obs_p), jnp.bfloat16).at[:, :enc_dim].set(
        enc_obs_1.astype(jnp.bfloat16))
    oh_pd = jnp.zeros((batch, act_p), jnp.bfloat16).at[:, :n_onehot].set(
        oh.astype(jnp.bfloat16))
    h = (jnp.dot(obs_pd, kparams["w1_obs"], preferred_element_type=jnp.float32)
         + jnp.dot(oh_pd, kparams["w1_act"], preferred_element_type=jnp.float32)
         + kparams["b1"])
    h = jnp.maximum(h, 0.0)
    h = jnp.maximum(jnp.dot(h.astype(jnp.bfloat16), kparams["w2"],
                            preferred_element_type=jnp.float32) + kparams["b2"], 0.0)
    ref_bf = (jnp.dot(h.astype(jnp.bfloat16), kparams["w3"],
                      preferred_element_type=jnp.float32) + kparams["b3"])
    ref_bf = ref_bf.astype(jnp.bfloat16).astype(jnp.float32)[:, :out_dim]
    err_bf = float(jnp.max(jnp.abs(out - ref_bf)))
    assert jnp.allclose(out, ref_bf, atol=2e-3, rtol=2e-3), err_bf

    # --- Reference 2: the TRUE f32 PyTorch-equivalent model (unpadded params)
    #     -> looser tolerance; catches bf16 precision drift.
    x = jnp.concatenate([enc_obs_1, oh], axis=1)
    h32 = jnp.maximum(x @ params["w1"] + params["b1"], 0.0)
    h32 = jnp.maximum(h32 @ params["w2"] + params["b2"], 0.0)
    ref32 = h32 @ params["w3"] + params["b3"]
    err32 = float(jnp.max(jnp.abs(out - ref32)))
    assert jnp.allclose(out, ref32, atol=1e-2, rtol=5e-2), err32

    print("KERNEL_OK")
</pallas_src>

<mosaic_0001>
module attributes {stable_mosaic.version = 11 : i64} {
  func.func @_icm_fwd_kernel(%arg0: i32, %arg1: memref<8x128xbf16, #tpu.memory_space<vmem>>, %arg2: memref<8x1xi32, #tpu.memory_space<vmem>>, %arg3: memref<128x128xbf16, #tpu.memory_space<vmem>>, %arg4: memref<128x128xbf16, #tpu.memory_space<vmem>>, %arg5: memref<1x128xf32, #tpu.memory_space<vmem>>, %arg6: memref<128x128xbf16, #tpu.memory_space<vmem>>, %arg7: memref<1x128xf32, #tpu.memory_space<vmem>>, %arg8: memref<128x128xbf16, #tpu.memory_space<vmem>>, %arg9: memref<1x128xf32, #tpu.memory_space<vmem>>, %arg10: memref<8x128xbf16, #tpu.memory_space<vmem>>) attributes {dimension_semantics = [#tpu.dimension_semantics<parallel>], iteration_bounds = array<i64: 1>, scalar_prefetch = 0 : i64, scratch_operands = 0 : i64, tpu.core_type = #tpu.core_type<tc>, window_params = [{transform_indices = @transform_0, window_bounds = array<i64: 8, 128>}, {transform_indices = @transform_1, window_bounds = array<i64: 8, 1>}, {pipeline_mode = #tpu.pipeline_mode<synchronous>, transform_indices = @transform_2, window_bounds = array<i64: 128, 128>}, {pipeline_mode = #tpu.pipeline_mode<synchronous>, transform_indices = @transform_3, window_bounds = array<i64: 128, 128>}, {pipeline_mode = #tpu.pipeline_mode<synchronous>, transform_indices = @transform_4, window_bounds = array<i64: 1, 128>}, {pipeline_mode = #tpu.pipeline_mode<synchronous>, transform_indices = @transform_5, window_bounds = array<i64: 128, 128>}, {pipeline_mode = #tpu.pipeline_mode<synchronous>, transform_indices = @transform_6, window_bounds = array<i64: 1, 128>}, {pipeline_mode = #tpu.pipeline_mode<synchronous>, transform_indices = @transform_7, window_bounds = array<i64: 128, 128>}, {pipeline_mode = #tpu.pipeline_mode<synchronous>, transform_indices = @transform_8, window_bounds = array<i64: 1, 128>}, {transform_indices = @transform_9, window_bounds = array<i64: 8, 128>}]} {
    %c0 = arith.constant 0 : index
    %c0_0 = arith.constant 0 : index
    %0 = vector.load %arg1[%c0, %c0_0] : memref<8x128xbf16, #tpu.memory_space<vmem>>, vector<8x128xbf16>
    %1 = tpu.iota {dimensions = array<i32: 1>} : vector<8x128xi32>
    %c0_1 = arith.constant 0 : index
    %c0_2 = arith.constant 0 : index
    %2 = vector.load %arg2[%c0_1, %c0_2] : memref<8x1xi32, #tpu.memory_space<vmem>>, vector<8x1xi32>
    %3 = vector.broadcast %2 : vector<8x1xi32> to vector<8x128xi32>
    %4 = arith.cmpi eq, %1, %3 : vector<8x128xi32>
    %cst = arith.constant 1.000000e+00 : f32
    %cst_3 = arith.constant 0.000000e+00 : f32
    %5 = vector.broadcast %cst : f32 to vector<8x128xf32>
    %6 = vector.broadcast %cst_3 : f32 to vector<8x128xf32>
    %7 = arith.select %4, %5, %6 : vector<8x128xi1>, vector<8x128xf32>
    %8 = arith.truncf %7 : vector<8x128xf32> to vector<8x128xbf16>
    %c0_4 = arith.constant 0 : index
    %c0_5 = arith.constant 0 : index
    %9 = vector.load %arg3[%c0_4, %c0_5] : memref<128x128xbf16, #tpu.memory_space<vmem>>, vector<128x128xbf16>
    %cst_6 = arith.constant dense<0.000000e+00> : vector<8x128xf32>
    %10 = tpu.matmul %0, %9, %cst_6 {dimension_numbers = #tpu.dot_dimension_numbers<[1], [0], [0], [1], [0, 0, 1, 1], [], []>} : vector<8x128xbf16>, vector<128x128xbf16>, vector<8x128xf32> -> vector<8x128xf32>
    %c0_7 = arith.constant 0 : index
    %c0_8 = arith.constant 0 : index
    %11 = vector.load %arg4[%c0_7, %c0_8] : memref<128x128xbf16, #tpu.memory_space<vmem>>, vector<128x128xbf16>
    %cst_9 = arith.constant dense<0.000000e+00> : vector<8x128xf32>
    %12 = tpu.matmul %8, %11, %cst_9 {dimension_numbers = #tpu.dot_dimension_numbers<[1], [0], [0], [1], [0, 0, 1, 1], [], []>} : vector<8x128xbf16>, vector<128x128xbf16>, vector<8x128xf32> -> vector<8x128xf32>
    %13 = arith.addf %10, %12 : vector<8x128xf32>
    %c0_10 = arith.constant 0 : index
    %c0_11 = arith.constant 0 : index
    %14 = vector.load %arg5[%c0_10, %c0_11] : memref<1x128xf32, #tpu.memory_space<vmem>>, vector<1x128xf32>
    %15 = vector.broadcast %14 : vector<1x128xf32> to vector<8x128xf32>
    %16 = arith.addf %13, %15 : vector<8x128xf32>
    %cst_12 = arith.constant 0.000000e+00 : f32
    %17 = vector.broadcast %cst_12 : f32 to vector<8x128xf32>
    %18 = arith.maximumf %16, %17 : vector<8x128xf32>
    %19 = arith.truncf %18 : vector<8x128xf32> to vector<8x128xbf16>
    %c0_13 = arith.constant 0 : index
    %c0_14 = arith.constant 0 : index
    %20 = vector.load %arg6[%c0_13, %c0_14] : memref<128x128xbf16, #tpu.memory_space<vmem>>, vector<128x128xbf16>
    %cst_15 = arith.constant dense<0.000000e+00> : vector<8x128xf32>
    %21 = tpu.matmul %19, %20, %cst_15 {dimension_numbers = #tpu.dot_dimension_numbers<[1], [0], [0], [1], [0, 0, 1, 1], [], []>} : vector<8x128xbf16>, vector<128x128xbf16>, vector<8x128xf32> -> vector<8x128xf32>
    %c0_16 = arith.constant 0 : index
    %c0_17 = arith.constant 0 : index
    %22 = vector.load %arg7[%c0_16, %c0_17] : memref<1x128xf32, #tpu.memory_space<vmem>>, vector<1x128xf32>
    %23 = vector.broadcast %22 : vector<1x128xf32> to vector<8x128xf32>
    %24 = arith.addf %21, %23 : vector<8x128xf32>
    %cst_18 = arith.constant 0.000000e+00 : f32
    %25 = vector.broadcast %cst_18 : f32 to vector<8x128xf32>
    %26 = arith.maximumf %24, %25 : vector<8x128xf32>
    %27 = arith.truncf %26 : vector<8x128xf32> to vector<8x128xbf16>
    %c0_19 = arith.constant 0 : index
    %c0_20 = arith.constant 0 : index
    %28 = vector.load %arg8[%c0_19, %c0_20] : memref<128x128xbf16, #tpu.memory_space<vmem>>, vector<128x128xbf16>
    %cst_21 = arith.constant dense<0.000000e+00> : vector<8x128xf32>
    %29 = tpu.matmul %27, %28, %cst_21 {dimension_numbers = #tpu.dot_dimension_numbers<[1], [0], [0], [1], [0, 0, 1, 1], [], []>} : vector<8x128xbf16>, vector<128x128xbf16>, vector<8x128xf32> -> vector<8x128xf32>
    %c0_22 = arith.constant 0 : index
    %c0_23 = arith.constant 0 : index
    %30 = vector.load %arg9[%c0_22, %c0_23] : memref<1x128xf32, #tpu.memory_space<vmem>>, vector<1x128xf32>
    %31 = vector.broadcast %30 : vector<1x128xf32> to vector<8x128xf32>
    %32 = arith.addf %29, %31 : vector<8x128xf32>
    %33 = arith.truncf %32 : vector<8x128xf32> to vector<8x128xbf16>
    %c0_24 = arith.constant 0 : index
    %c0_25 = arith.constant 0 : index
    %34 = vector.load %arg10[%c0_24, %c0_25] : memref<8x128xbf16, #tpu.memory_space<vmem>>, vector<8x128xbf16>
    tpu.vector_store %arg10[%c0_24, %c0_25], %33 {strides = array<i32>} : memref<8x128xbf16, #tpu.memory_space<vmem>>, vector<8x128xbf16>,
    return
  }
  func.func @transform_0(%arg0: i32) -> (i32, i32) {
    %c0_i32 = arith.constant 0 : i32
    %c0_i32_0 = arith.constant 0 : i32
    return %arg0, %c0_i32 : i32, i32
  }
  func.func @transform_1(%arg0: i32) -> (i32, i32) {
    %c0_i32 = arith.constant 0 : i32
    %c0_i32_0 = arith.constant 0 : i32
    return %arg0, %c0_i32 : i32, i32
  }
  func.func @transform_2(%arg0: i32) -> (i32, i32) {
    %c0_i32 = arith.constant 0 : i32
    %c0_i32_0 = arith.constant 0 : i32
    %c0_i32_1 = arith.constant 0 : i32
    return %c0_i32, %c0_i32_0 : i32, i32
  }
  func.func @transform_3(%arg0: i32) -> (i32, i32) {
    %c0_i32 = arith.constant 0 : i32
    %c0_i32_0 = arith.constant 0 : i32
    %c0_i32_1 = arith.constant 0 : i32
    return %c0_i32, %c0_i32_0 : i32, i32
  }
  func.func @transform_4(%arg0: i32) -> (i32, i32) {
    %c0_i32 = arith.constant 0 : i32
    %c0_i32_0 = arith.constant 0 : i32
    %c0_i32_1 = arith.constant 0 : i32
    return %c0_i32, %c0_i32_0 : i32, i32
  }
  func.func @transform_5(%arg0: i32) -> (i32, i32) {
    %c0_i32 = arith.constant 0 : i32
    %c0_i32_0 = arith.constant 0 : i32
    %c0_i32_1 = arith.constant 0 : i32
    return %c0_i32, %c0_i32_0 : i32, i32
  }
  func.func @transform_6(%arg0: i32) -> (i32, i32) {
    %c0_i32 = arith.constant 0 : i32
    %c0_i32_0 = arith.constant 0 : i32
    %c0_i32_1 = arith.constant 0 : i32
    return %c0_i32, %c0_i32_0 : i32, i32
  }
  func.func @transform_7(%arg0: i32) -> (i32, i32) {
    %c0_i32 = arith.constant 0 : i32
    %c0_i32_0 = arith.constant 0 : i32
    %c0_i32_1 = arith.constant 0 : i32
    return %c0_i32, %c0_i32_0 : i32, i32
  }
  func.func @transform_8(%arg0: i32) -> (i32, i32) {
    %c0_i32 = arith.constant 0 : i32
    %c0_i32_0 = arith.constant 0 : i32
    %c0_i32_1 = arith.constant 0 : i32
    return %c0_i32, %c0_i32_0 : i32, i32
  }
  func.func @transform_9(%arg0: i32) -> (i32, i32) {
    %c0_i32 = arith.constant 0 : i32
    %c0_i32_0 = arith.constant 0 : i32
    return %arg0, %c0_i32 : i32, i32
  }
}

</mosaic_0001>

<llo_original>
// kernel: tpu_custom_call.1
$region0: #{tpu_custom_call.1}
  #allocation0 [shape = 'u32[]', space=smem, size = 0x4, offset = 0x4, fixed_abs, tag = 'smem constant byte address 0x4 - core index']
  #allocation1 [shape = 'u32[72,128]{1,0:T(1,128)}', space=vmem, size = 0x9000, scoped, tag = 'internal scratch']
  %s0 = inlined_call_operand.vmem [shape: bf16[8,128], index: 0, kind: input, shape index: {}]
  %s1 = inlined_call_operand.vmem [shape: s32[8,1], index: 1, kind: input, shape index: {}]
  %s2 = inlined_call_operand.hbm [shape: bf16[128,128], index: 2, kind: input, shape index: {}]
  %s3 = inlined_call_operand.hbm [shape: bf16[128,128], index: 3, kind: input, shape index: {}]
  %s4 = inlined_call_operand.vmem [shape: f32[1,128], index: 4, kind: input, shape index: {}]
  %s5 = inlined_call_operand.hbm [shape: bf16[128,128], index: 5, kind: input, shape index: {}]
  %s6 = inlined_call_operand.vmem [shape: f32[1,128], index: 6, kind: input, shape index: {}]
  %s7 = inlined_call_operand.hbm [shape: bf16[128,128], index: 7, kind: input, shape index: {}]
  %s8 = inlined_call_operand.vmem [shape: f32[1,128], index: 8, kind: input, shape index: {}]
  %s9 = inlined_call_operand.hbm [shape: bf16[8,128], index: 9, kind: output, shape index: {}]
  %s10 = sld [smem:[#allocation0]]
  $region62: #{tpu_custom_call.1} parent=0
    _
  %s12 = ssub.s32 1, %s10
  %s13 = scalar_select 0, %s12, %s10
  $region1: #{tpu_custom_call.1} parent=0
    #allocation2 [shape = 'u8[32768]{0}', space=vmem, size = 0x8000, scoped, tag = 'input window, operand 2, single buffered']
    #allocation3 [shape = 's32[1]{0}', space=sflag, size = 0x4, scoped, tag = 'scoped memory for tpu_custom_call.1']
    #allocation4 [shape = 's32[1]{0}', space=sflag, size = 0x4, scoped, tag = 'scoped memory for tpu_custom_call.1']
    #allocation5 [shape = 'u8[32768]{0}', space=vmem, size = 0x8000, scoped, tag = 'input window, operand 3, single buffered']
    #allocation6 [shape = 's32[1]{0}', space=sflag, size = 0x4, scoped, tag = 'scoped memory for tpu_custom_call.1']
    #allocation7 [shape = 'u8[32768]{0}', space=vmem, size = 0x8000, scoped, tag = 'input window, operand 5, single buffered']
    #allocation8 [shape = 'u8[32768]{0}', space=vmem, size = 0x8000, scoped, tag = 'input window, operand 7, single buffered']
    #allocation9 [shape = 's32[1]{0}', space=sflag, size = 0x4, scoped, tag = 'scoped memory for tpu_custom_call.1']
    #allocation10 [shape = 'u8[2048]{0}', space=vmem, size = 0x800, scoped, tag = 'output window, operand 0, single buffered']
    %14 = vsyncpa [#allocation3], 0
    %15 = vsyncpa [#allocation6], 0
    %16 = vsyncpa [#allocation9], 0
    %17 = vsyncpa [#allocation4], 0
    // Predicated region
    $region2: #{tpu_custom_call.1} parent=1 // pred_check
      _
    $region3: #{tpu_custom_call.1} parent=1 // pred_check_branch
      %19 = sbr.rel (0) target = $region5
    $region4: #{tpu_custom_call.1} parent=1 // pred_region
      _
    $region5: #{tpu_custom_call.1} parent=1 // pred_fallthru
      _
    // Predicated region
    $region6: #{tpu_custom_call.1} parent=1 // pred_check
      _
    $region7: #{tpu_custom_call.1} parent=1 // pred_check_branch
      %21 = sbr.rel (0) target = $region9
    $region8: #{tpu_custom_call.1} parent=1 // pred_region
      _
    $region9: #{tpu_custom_call.1} parent=1 // pred_fallthru
      _
    // Predicated region
    $region10: #{tpu_custom_call.1} parent=1 // pred_check
      _
    $region11: #{tpu_custom_call.1} parent=1 // pred_check_branch
      %23 = sbr.rel (0) target = $region13
    $region12: #{tpu_custom_call.1} parent=1 // pred_region
      %25 = vsyncadd [#allocation3], 0
      %s26 = sshll.u32 %s2, 4
      %s27 = int_to_ptr.hbm [resolvable:$true] %s26
      %s28 = sshll.u32 [#allocation2], 4
      %s29 = int_to_ptr.vmem [resolvable:$true] %s28
      %34 = dma.hbm_to_vmem [thread:$0]  %s27, 1024, %s29, [#allocation3], 64, 64, 4
    $region13: #{tpu_custom_call.1} parent=1 // pred_fallthru
      _
    // Predicated region
    $region14: #{tpu_custom_call.1} parent=1 // pred_check
      _
    $region15: #{tpu_custom_call.1} parent=1 // pred_check_branch
      %36 = sbr.rel (0) target = $region17
    $region16: #{tpu_custom_call.1} parent=1 // pred_region
      %38 = vsyncadd [#allocation6], 0
      %s39 = sshll.u32 %s3, 4
      %s40 = int_to_ptr.hbm [resolvable:$true] %s39
      %s41 = sshll.u32 [#allocation5], 4
      %s42 = int_to_ptr.vmem [resolvable:$true] %s41
      %47 = dma.hbm_to_vmem [thread:$0]  %s40, 1024, %s42, [#allocation6], 64, 64, 4
    $region17: #{tpu_custom_call.1} parent=1 // pred_fallthru
      _
    // Predicated region
    $region18: #{tpu_custom_call.1} parent=1 // pred_check
      _
    $region19: #{tpu_custom_call.1} parent=1 // pred_check_branch
      %49 = sbr.rel (0) target = $region21
    $region20: #{tpu_custom_call.1} parent=1 // pred_region
      _
    $region21: #{tpu_custom_call.1} parent=1 // pred_fallthru
      _
    // Predicated region
    $region22: #{tpu_custom_call.1} parent=1 // pred_check
      _
    $region23: #{tpu_custom_call.1} parent=1 // pred_check_branch
      %51 = sbr.rel (0) target = $region25
    $region24: #{tpu_custom_call.1} parent=1 // pred_region
      %53 = vsyncadd [#allocation6], 0
      %s54 = sshll.u32 %s5, 4
      %s55 = int_to_ptr.hbm [resolvable:$true] %s54
      %s56 = sshll.u32 [#allocation7], 4
      %s57 = int_to_ptr.vmem [resolvable:$true] %s56
      %62 = dma.hbm_to_vmem [thread:$0]  %s55, 1024, %s57, [#allocation6], 64, 64, 4
    $region25: #{tpu_custom_call.1} parent=1 // pred_fallthru
      _
    // Predicated region
    $region26: #{tpu_custom_call.1} parent=1 // pred_check
      _
    $region27: #{tpu_custom_call.1} parent=1 // pred_check_branch
      %64 = sbr.rel (0) target = $region29
    $region28: #{tpu_custom_call.1} parent=1 // pred_region
      _
    $region29: #{tpu_custom_call.1} parent=1 // pred_fallthru
      _
    // Predicated region
    $region30: #{tpu_custom_call.1} parent=1 // pred_check
      _
    $region31: #{tpu_custom_call.1} parent=1 // pred_check_branch
      %66 = sbr.rel (0) target = $region33
    $region32: #{tpu_custom_call.1} parent=1 // pred_region
      %68 = vsyncadd [#allocation9], 0
      %s69 = sshll.u32 %s7, 4
      %s70 = int_to_ptr.hbm [resolvable:$true] %s69
      %s71 = sshll.u32 [#allocation8], 4
      %s72 = int_to_ptr.vmem [resolvable:$true] %s71
      %77 = dma.hbm_to_vmem [thread:$0]  %s70, 1024, %s72, [#allocation9], 64, 64, 4
    $region33: #{tpu_custom_call.1} parent=1 // pred_fallthru
      _
    // Predicated region
    $region34: #{tpu_custom_call.1} parent=1 // pred_check
      _
    $region35: #{tpu_custom_call.1} parent=1 // pred_check_branch
      %79 = sbr.rel (0) target = $region37
    $region36: #{tpu_custom_call.1} parent=1 // pred_region
      _
    $region37: #{tpu_custom_call.1} parent=1 // pred_fallthru
      _
    // Predicated region
    $region38: #{tpu_custom_call.1} parent=1 // pred_check
      _
    $region39: #{tpu_custom_call.1} parent=1 // pred_check_branch
      %81 = sbr.rel (0) target = $region41
    $region40: #{tpu_custom_call.1} parent=1 // pred_region
      %83 = dma.done [#allocation3], 1024
    $region41: #{tpu_custom_call.1} parent=1 // pred_fallthru
      _
    // Predicated region
    $region42: #{tpu_custom_call.1} parent=1 // pred_check
      _
    $region43: #{tpu_custom_call.1} parent=1 // pred_check_branch
      %85 = sbr.rel (0) target = $region45
    $region44: #{tpu_custom_call.1} parent=1 // pred_region
      %87 = dma.done [#allocation6], 1024
    $region45: #{tpu_custom_call.1} parent=1 // pred_fallthru
      _
    // Predicated region
    $region46: #{tpu_custom_call.1} parent=1 // pred_check
      _
    $region47: #{tpu_custom_call.1} parent=1 // pred_check_branch
      %89 = sbr.rel (0) target = $region49
    $region48: #{tpu_custom_call.1} parent=1 // pred_region
      %91 = dma.done [#allocation6], 1024
    $region49: #{tpu_custom_call.1} parent=1 // pred_fallthru
      _
    // Predicated region
    $region50: #{tpu_custom_call.1} parent=1 // pred_check
      _
    $region51: #{tpu_custom_call.1} parent=1 // pred_check_branch
      %93 = sbr.rel (0) target = $region53
    $region52: #{tpu_custom_call.1} parent=1 // pred_region
      %95 = dma.done [#allocation9], 1024
    $region53: #{tpu_custom_call.1} parent=1 // pred_fallthru
      _
    %v96 = vld [vmem:[%s0] sm:$0xf]
    %v97 = vlaneseq
    %v98 = vand.u32 %v97, 127
    %v99 = vld [vmem:[%s1] sm:$0xff]
    %100 = vset.pattern.permute.xlu0 0
    %101 = vperm.xlu0 %100, %v99
    %v102 = vpop.permute.xlu0 %101
    %vm103 = vcmp.eq.s32.totalorder %v98, %v102
    %v104 = vsel %vm103, 1.0, 0.0
    %v105 = vpack.c.bf16 %v104, %v104
    %v106 = vld [vmem:[#allocation2] sm:$0xf]
    %v107 = vld [vmem:[#allocation2 + $0x4] sm:$0xf]
    %v108 = vld [vmem:[#allocation2 + $0x8] sm:$0xf]
    %v109 = vld [vmem:[#allocation2 + $0xc] sm:$0xf]
    %v110 = vld [vmem:[#allocation2 + $0x10] sm:$0xf]
    %v111 = vld [vmem:[#allocation2 + $0x14] sm:$0xf]
    %v112 = vld [vmem:[#allocation2 + $0x18] sm:$0xf]
    %v113 = vld [vmem:[#allocation2 + $0x1c] sm:$0xf]
    %v114 = vld [vmem:[#allocation2 + $0x20] sm:$0xf]
    %v115 = vld [vmem:[#allocation2 + $0x24] sm:$0xf]
    %v116 = vld [vmem:[#allocation2 + $0x28] sm:$0xf]
    %v117 = vld [vmem:[#allocation2 + $0x2c] sm:$0xf]
    %v118 = vld [vmem:[#allocation2 + $0x30] sm:$0xf]
    %v119 = vld [vmem:[#allocation2 + $0x34] sm:$0xf]
    %v120 = vld [vmem:[#allocation2 + $0x38] sm:$0xf]
    %v121 = vld [vmem:[#allocation2 + $0x3c] sm:$0xf]
    %v122 = vld [vmem:[#allocation5] sm:$0xf]
    %v123 = vld [vmem:[#allocation5 + $0x4] sm:$0xf]
    %v124 = vld [vmem:[#allocation5 + $0x8] sm:$0xf]
    %v125 = vld [vmem:[#allocation5 + $0xc] sm:$0xf]
    %v126 = vld [vmem:[#allocation5 + $0x10] sm:$0xf]
    %v127 = vld [vmem:[#allocation5 + $0x14] sm:$0xf]
    %v128 = vld [vmem:[#allocation5 + $0x18] sm:$0xf]
    %v129 = vld [vmem:[#allocation5 + $0x1c] sm:$0xf]
    %v130 = vld [vmem:[#allocation5 + $0x20] sm:$0xf]
    %v131 = vld [vmem:[#allocation5 + $0x24] sm:$0xf]
    %v132 = vld [vmem:[#allocation5 + $0x28] sm:$0xf]
    %v133 = vld [vmem:[#allocation5 + $0x2c] sm:$0xf]
    %v134 = vld [vmem:[#allocation5 + $0x30] sm:$0xf]
    %v135 = vld [vmem:[#allocation5 + $0x34] sm:$0xf]
    %v136 = vld [vmem:[#allocation5 + $0x38] sm:$0xf]
    %v137 = vld [vmem:[#allocation5 + $0x3c] sm:$0xf]
    %v154 = vunpack.c.l.b16 %v122
    %v155 = vunpack.c.l.b16 %v123
    %v156 = vunpack.c.l.b16 %v124
    %v157 = vunpack.c.l.b16 %v125
    %v158 = vunpack.c.l.b16 %v126
    %v159 = vunpack.c.l.b16 %v127
    %v160 = vunpack.c.l.b16 %v128
    %v161 = vunpack.c.l.b16 %v129
    %v162 = vunpack.c.l.b16 %v130
    %v163 = vunpack.c.l.b16 %v131
    %v164 = vunpack.c.l.b16 %v132
    %v165 = vunpack.c.l.b16 %v133
    %v166 = vunpack.c.l.b16 %v134
    %v167 = vunpack.c.l.b16 %v135
    %v168 = vunpack.c.l.b16 %v136
    %v169 = vunpack.c.l.b16 %v137
    %v170 = vpack.c.b16 %v155, %v154
    %v171 = vpack.c.b16 %v157, %v156
    %v172 = vpack.c.b16 %v159, %v158
    %v173 = vpack.c.b16 %v161, %v160
    %v174 = vpack.c.b16 %v163, %v162
    %v175 = vpack.c.b16 %v165, %v164
    %v176 = vpack.c.b16 %v167, %v166
    %v177 = vpack.c.b16 %v169, %v168
    %186 = vmatpush.bf16.msra.mxu0 %v177
    %187 = vmatpush.bf16.msra.mxu0 %v176
    %188 = vmatpush.bf16.msra.mxu0 %v175
    %189 = vmatpush.bf16.msra.mxu0 %v174
    %190 = vmatpush.bf16.msra.mxu0 %v173
    %191 = vmatpush.bf16.msra.mxu0 %v172
    %192 = vmatpush.bf16.msra.mxu0 %v171
    %193 = vmatpush.bf16.msra.mxu0 %v170
    %194 = vmatmul.bf16.gmra.mxu0 %v105
    %v195 = vpop.f32.mrf.mxu0
    %v196 = vadd.f32 0.0, %v195
    %v197 = vpop.f32.mrf.mxu0
    %198 = vdwg.mxu0
    %v215 = vunpack.c.l.b16 %v106
    %v216 = vunpack.c.l.b16 %v107
    %v217 = vunpack.c.l.b16 %v108
    %v218 = vunpack.c.l.b16 %v109
    %v219 = vunpack.c.l.b16 %v110
    %v220 = vunpack.c.l.b16 %v111
    %v221 = vunpack.c.l.b16 %v112
    %v222 = vunpack.c.l.b16 %v113
    %v223 = vunpack.c.l.b16 %v114
    %v224 = vunpack.c.l.b16 %v115
    %v225 = vunpack.c.l.b16 %v116
    %v226 = vunpack.c.l.b16 %v117
    %v227 = vunpack.c.l.b16 %v118
    %v228 = vunpack.c.l.b16 %v119
    %v229 = vunpack.c.l.b16 %v120
    %v230 = vunpack.c.l.b16 %v121
    %v231 = vpack.c.b16 %v216, %v215
    %v232 = vpack.c.b16 %v218, %v217
    %v233 = vpack.c.b16 %v220, %v219
    %v234 = vpack.c.b16 %v222, %v221
    %v235 = vpack.c.b16 %v224, %v223
    %v236 = vpack.c.b16 %v226, %v225
    %v237 = vpack.c.b16 %v228, %v227
    %v238 = vpack.c.b16 %v230, %v229
    %247 = vmatpush.bf16.msra.mxu0 %v238
    %248 = vmatpush.bf16.msra.mxu0 %v237
    %249 = vmatpush.bf16.msra.mxu0 %v236
    %250 = vmatpush.bf16.msra.mxu0 %v235
    %251 = vmatpush.bf16.msra.mxu0 %v234
    %252 = vmatpush.bf16.msra.mxu0 %v233
    %253 = vmatpush.bf16.msra.mxu0 %v232
    %254 = vmatpush.bf16.msra.mxu0 %v231
    %255 = vmatmul.bf16.gmra.mxu0 %v96
    %v256 = vpop.f32.mrf.mxu0
    %v257 = vadd.f32 %v196, %v256
    %v258 = vpop.f32.mrf.mxu0
    %259 = vdwg.mxu0
    %v260 = vld [vmem:[%s4] sm:$0x1]
    %v262 = vperm.slane %v260, 0
    %v264 = vadd.f32 %v257, %v262
    %v265 = vmax.f32 %v264, 0.0
    %v266 = vpack.c.bf16 %v265, %v265
    %v267 = vld [vmem:[#allocation7] sm:$0xf]
    %v268 = vld [vmem:[#allocation7 + $0x4] sm:$0xf]
    %v269 = vld [vmem:[#allocation7 + $0x8] sm:$0xf]
    %v270 = vld [vmem:[#allocation7 + $0xc] sm:$0xf]
    %v271 = vld [vmem:[#allocation7 + $0x10] sm:$0xf]
    %v272 = vld [vmem:[#allocation7 + $0x14] sm:$0xf]
    %v273 = vld [vmem:[#allocation7 + $0x18] sm:$0xf]
    %v274 = vld [vmem:[#allocation7 + $0x1c] sm:$0xf]
    %v275 = vld [vmem:[#allocation7 + $0x20] sm:$0xf]
    %v276 = vld [vmem:[#allocation7 + $0x24] sm:$0xf]
    %v277 = vld [vmem:[#allocation7 + $0x28] sm:$0xf]
    %v278 = vld [vmem:[#allocation7 + $0x2c] sm:$0xf]
    %v279 = vld [vmem:[#allocation7 + $0x30] sm:$0xf]
    %v280 = vld [vmem:[#allocation7 + $0x34] sm:$0xf]
    %v281 = vld [vmem:[#allocation7 + $0x38] sm:$0xf]
    %v282 = vld [vmem:[#allocation7 + $0x3c] sm:$0xf]
    %v283 = vld [vmem:[%s6] sm:$0x1]
    %v285 = vperm.slane %v283, 0
    %v303 = vunpack.c.l.b16 %v267
    %v304 = vunpack.c.l.b16 %v268
    %v305 = vunpack.c.l.b16 %v269
    %v306 = vunpack.c.l.b16 %v270
    %v307 = vunpack.c.l.b16 %v271
    %v308 = vunpack.c.l.b16 %v272
    %v309 = vunpack.c.l.b16 %v273
    %v310 = vunpack.c.l.b16 %v274
    %v311 = vunpack.c.l.b16 %v275
    %v312 = vunpack.c.l.b16 %v276
    %v313 = vunpack.c.l.b16 %v277
    %v314 = vunpack.c.l.b16 %v278
    %v315 = vunpack.c.l.b16 %v279
    %v316 = vunpack.c.l.b16 %v280
    %v317 = vunpack.c.l.b16 %v281
    %v318 = vunpack.c.l.b16 %v282
    %v319 = vpack.c.b16 %v304, %v303
    %v320 = vpack.c.b16 %v306, %v305
    %v321 = vpack.c.b16 %v308, %v307
    %v322 = vpack.c.b16 %v310, %v309
    %v323 = vpack.c.b16 %v312, %v311
    %v324 = vpack.c.b16 %v314, %v313
    %v325 = vpack.c.b16 %v316, %v315
    %v326 = vpack.c.b16 %v318, %v317
    %335 = vmatpush.bf16.msra.mxu0 %v326
    %336 = vmatpush.bf16.msra.mxu0 %v325
    %337 = vmatpush.bf16.msra.mxu0 %v324
    %338 = vmatpush.bf16.msra.mxu0 %v323
    %339 = vmatpush.bf16.msra.mxu0 %v322
    %340 = vmatpush.bf16.msra.mxu0 %v321
    %341 = vmatpush.bf16.msra.mxu0 %v320
    %342 = vmatpush.bf16.msra.mxu0 %v319
    %343 = vmatmul.bf16.gmra.mxu0 %v266
    %v344 = vpop.f32.mrf.mxu0
    %v345 = vadd.f32 %v285, %v344
    %v346 = vpop.f32.mrf.mxu0
    %347 = vdwg.mxu0
    %v348 = vmax.f32 %v345, 0.0
    %v349 = vpack.c.bf16 %v348, %v348
    %v350 = vld [vmem:[#allocation8] sm:$0xf]
    %v351 = vld [vmem:[#allocation8 + $0x4] sm:$0xf]
    %v352 = vld [vmem:[#allocation8 + $0x8] sm:$0xf]
    %v353 = vld [vmem:[#allocation8 + $0xc] sm:$0xf]
    %v354 = vld [vmem:[#allocation8 + $0x10] sm:$0xf]
    %v355 = vld [vmem:[#allocation8 + $0x14] sm:$0xf]
    %v356 = vld [vmem:[#allocation8 + $0x18] sm:$0xf]
    %v357 = vld [vmem:[#allocation8 + $0x1c] sm:$0xf]
    %v358 = vld [vmem:[#allocation8 + $0x20] sm:$0xf]
    %v359 = vld [vmem:[#allocation8 + $0x24] sm:$0xf]
    %v360 = vld [vmem:[#allocation8 + $0x28] sm:$0xf]
    %v361 = vld [vmem:[#allocation8 + $0x2c] sm:$0xf]
    %v362 = vld [vmem:[#allocation8 + $0x30] sm:$0xf]
    %v363 = vld [vmem:[#allocation8 + $0x34] sm:$0xf]
    %v364 = vld [vmem:[#allocation8 + $0x38] sm:$0xf]
    %v365 = vld [vmem:[#allocation8 + $0x3c] sm:$0xf]
    %v366 = vld [vmem:[%s8] sm:$0x1]
    %v368 = vperm.slane %v366, 0
    %v386 = vunpack.c.l.b16 %v350
    %v387 = vunpack.c.l.b16 %v351
    %v388 = vunpack.c.l.b16 %v352
    %v389 = vunpack.c.l.b16 %v353
    %v390 = vunpack.c.l.b16 %v354
    %v391 = vunpack.c.l.b16 %v355
    %v392 = vunpack.c.l.b16 %v356
    %v393 = vunpack.c.l.b16 %v357
    %v394 = vunpack.c.l.b16 %v358
    %v395 = vunpack.c.l.b16 %v359
    %v396 = vunpack.c.l.b16 %v360
    %v397 = vunpack.c.l.b16 %v361
    %v398 = vunpack.c.l.b16 %v362
    %v399 = vunpack.c.l.b16 %v363
    %v400 = vunpack.c.l.b16 %v364
    %v401 = vunpack.c.l.b16 %v365
    %v402 = vpack.c.b16 %v387, %v386
    %v403 = vpack.c.b16 %v389, %v388
    %v404 = vpack.c.b16 %v391, %v390
    %v405 = vpack.c.b16 %v393, %v392
    %v406 = vpack.c.b16 %v395, %v394
    %v407 = vpack.c.b16 %v397, %v396
    %v408 = vpack.c.b16 %v399, %v398
    %v409 = vpack.c.b16 %v401, %v400
    %418 = vmatpush.bf16.msra.mxu0 %v409
    %419 = vmatpush.bf16.msra.mxu0 %v408
    %420 = vmatpush.bf16.msra.mxu0 %v407
    %421 = vmatpush.bf16.msra.mxu0 %v406
    %422 = vmatpush.bf16.msra.mxu0 %v405
    %423 = vmatpush.bf16.msra.mxu0 %v404
    %424 = vmatpush.bf16.msra.mxu0 %v403
    %425 = vmatpush.bf16.msra.mxu0 %v402
    %426 = vmatmul.bf16.gmra.mxu0 %v349
    %v427 = vpop.f32.mrf.mxu0
    %v428 = vadd.f32 %v368, %v427
    %v429 = vpop.f32.mrf.mxu0
    %430 = vdwg.mxu0
    %v431 = vpack.c.bf16 %v428, %v428
    %432 = vst [vmem:[#allocation10] sm:$0xf] %v431
    // Predicated region
    $region54: #{tpu_custom_call.1} parent=1 // pred_check
      _
    $region55: #{tpu_custom_call.1} parent=1 // pred_check_branch
      %434 = sbr.rel (0) target = $region57
    $region56: #{tpu_custom_call.1} parent=1 // pred_region
      %436 = vsyncadd [#allocation4], 0
      %s438 = sshll.u32 [#allocation10], 4
      %s439 = int_to_ptr.vmem [resolvable:$true] %s438
      %s440 = sshll.u32 %s9, 4
      %s441 = int_to_ptr.hbm [resolvable:$true] %s440
      %443 = dma.vmem_to_hbm [thread:$0]  %s439, 64, %s441, [#allocation4]
    $region57: #{tpu_custom_call.1} parent=1 // pred_fallthru
      _
    // Predicated region
    $region58: #{tpu_custom_call.1} parent=1 // pred_check
      _
    $region59: #{tpu_custom_call.1} parent=1 // pred_check_branch
      %445 = sbr.rel (0) target = $region61
    $region60: #{tpu_custom_call.1} parent=1 // pred_region
      %447 = dma.done [#allocation4], 64
    $region61: #{tpu_custom_call.1} parent=1 // pred_fallthru
      _
    %448 = vsyncpa [#allocation3], 1
    %449 = vsyncpa [#allocation6], 1
    %450 = vsyncpa [#allocation9], 1
    %451 = vsyncpa [#allocation4], 1

</llo_original>
